<compile_context>
chip_gen: v5e
topology: v5e:2x2
jax: 0.10.0
libtpu: 0.0.40
codegen_flags: <defaults>
</compile_context>

<pallas_src>
import functools

import jax
import jax.numpy as jnp
from jax import lax
from jax.experimental import pallas as pl
from jax.experimental.pallas import tpu as pltpu

N_GMM = 2
Z_DIM = 1
D_IN = 118
PAD = 128          # lane-padded feature width
TB_MAX = 256       # max batch tile (sublane-aligned, VMEM footprint well < 6 MiB)

# (fan_in, fan_out) of fc1..fc10
LAYER_DIMS = [
    (118, 60), (60, 30), (30, 10), (10, Z_DIM),        # encoder
    (Z_DIM, 10), (10, 30), (30, 60), (60, 118),         # decoder
    (Z_DIM + 2, 10), (10, N_GMM),                       # estimation net
]


def _round_up(x, m):
    return -(-x // m) * m


def _dagmm_kernel(x_ref, drop_ref, w_ref, b_ref, xhat_ref, zpack_ref,
                  *, z_dim, n_gmm):
    # w_ref: (10,128,128) stacked padded W^T; b_ref: (10,1,128) stacked padded bias.
    def lin(h, idx):
        return jnp.dot(h, w_ref[idx], preferred_element_type=jnp.float32) + b_ref[idx]

    x = x_ref[...]                         # (TB,128); real features in lanes [0,118)

    # ---- encode ----
    h = jnp.tanh(lin(x, 0))
    h = jnp.tanh(lin(h, 1))
    h = jnp.tanh(lin(h, 2))
    z_c = lin(h, 3)                        # real lanes [0, z_dim)

    # ---- decode ----
    h = jnp.tanh(lin(z_c, 4))
    h = jnp.tanh(lin(h, 5))
    h = jnp.tanh(lin(h, 6))
    x_hat = lin(h, 7)                      # real lanes [0, 118)

    # ---- reconstruction features (per-row reductions over the lane axis) ----
    ss_x = jnp.sum(x * x, axis=-1, keepdims=True)
    ss_xh = jnp.sum(x_hat * x_hat, axis=-1, keepdims=True)
    dot_xxh = jnp.sum(x * x_hat, axis=-1, keepdims=True)
    # ||x - x_hat||^2 algebraically; clamp tiny negative cancellation at 0.
    ss_diff = jnp.maximum(ss_x - 2.0 * dot_xxh + ss_xh, 0.0)
    norm_x = jnp.sqrt(ss_x)
    norm_xh = jnp.sqrt(ss_xh)
    # torch rec1 has no eps; only guard the all-zero (padded batch) rows so the
    # kernel stays NaN-free.  Real rows are bit-identical to sqrt(ss)/norm_x.
    safe_norm_x = jnp.where(ss_x > 0.0, norm_x, 1.0)
    rec1 = jnp.sqrt(ss_diff) / safe_norm_x
    eps = 1e-8                                              # F.cosine_similarity eps
    rec2 = dot_xxh / (jnp.maximum(norm_x, eps) * jnp.maximum(norm_xh, eps))

    # ---- z = cat([z_c, rec1, rec2], dim=1), built in the padded lane frame ----
    col = lax.broadcasted_iota(jnp.int32, x.shape, 1)
    z = jnp.where(col < z_dim, z_c, 0.0)
    z = jnp.where(col == z_dim, rec1, z)
    z = jnp.where(col == z_dim + 1, rec2, z)

    # ---- estimation net ----
    h = jnp.tanh(lin(z, 8))
    # Training-mode dropout(p=0.5): mask values are 0.0 / 2.0, generated with
    # jax.random in the wrapper (on-chip PRNG has no interpret-mode lowering).
    # TODO(synk): torch's dropout RNG stream cannot be reproduced bit-for-bit.
    h = h * drop_ref[...]

    # fc10's padded weight columns/bias were placed at lane offset z_dim+2, so
    # its logits (and hence gamma) land directly in the spare lanes of z.
    logits = lin(h, 9)
    lane_lo = z_dim + 2
    gmm_mask = (col >= lane_lo) & (col < lane_lo + n_gmm)
    logits = jnp.where(gmm_mask, logits, -1e30)             # mask padded lanes
    m = jnp.max(logits, axis=-1, keepdims=True)
    e = jnp.exp(logits - m)                                  # padded lanes -> exactly 0
    gamma = e / jnp.sum(e, axis=-1, keepdims=True)           # softmax over dim=1

    xhat_ref[...] = x_hat
    # packed output lanes: [z_c | rec1 | rec2 | gamma(n_gmm) | 0...]
    zpack_ref[...] = z + gamma


def init_params(key):
    """Deterministic init matching torch.nn.Linear defaults: U(-1/sqrt(in), 1/sqrt(in))."""
    params = []
    for (fan_in, fan_out) in LAYER_DIMS:
        key, kw, kb = jax.random.split(key, 3)
        bound = 1.0 / (fan_in ** 0.5)
        w = jax.random.uniform(kw, (fan_out, fan_in), jnp.float32, -bound, bound)
        b = jax.random.uniform(kb, (fan_out,), jnp.float32, -bound, bound)
        params.append((w, b))
    return params


def _pad_params(params):
    """Stack padded W^T into (10,128,128) and biases into (10,1,128).

    The last layer (fc10) is padded at lane offset Z_DIM+2 so its outputs land
    in the spare lanes of the packed z output.
    """
    ws, bs = [], []
    last = len(params) - 1
    for li, (w, b) in enumerate(params):
        fan_out, fan_in = w.shape
        off = (Z_DIM + 2) if li == last else 0
        wt = jnp.zeros((PAD, PAD), jnp.float32).at[:fan_in, off:off + fan_out].set(w.T)
        bp = jnp.zeros((1, PAD), jnp.float32).at[0, off:off + fan_out].set(b)
        ws.append(wt)
        bs.append(bp)
    return jnp.stack(ws), jnp.stack(bs)


def dagmm_forward(x, params, dropout_key):
    B = x.shape[0]
    tb = min(TB_MAX, _round_up(B, 8))
    b_pad = _round_up(B, tb)

    x_pad = jnp.zeros((b_pad, PAD), jnp.float32).at[:B, :D_IN].set(x.astype(jnp.float32))
    keep = jax.random.bernoulli(dropout_key, 0.5, (b_pad, PAD))
    drop = keep.astype(jnp.float32) * 2.0                    # 0.0 / 2.0 scale

    w_stack, b_stack = _pad_params(params)

    row_spec = pl.BlockSpec((tb, PAD), lambda i: (i, 0))
    w_spec = pl.BlockSpec((len(LAYER_DIMS), PAD, PAD), lambda i: (0, 0, 0))
    b_spec = pl.BlockSpec((len(LAYER_DIMS), 1, PAD), lambda i: (0, 0, 0))

    kernel = functools.partial(_dagmm_kernel, z_dim=Z_DIM, n_gmm=N_GMM)
    xhat_p, zpack_p = pl.pallas_call(
        kernel,
        out_shape=[jax.ShapeDtypeStruct((b_pad, PAD), jnp.float32)] * 2,
        grid_spec=pltpu.PrefetchScalarGridSpec(
            num_scalar_prefetch=0,
            grid=(b_pad // tb,),
            in_specs=[row_spec, row_spec, w_spec, b_spec],
            out_specs=[row_spec, row_spec],
        ),
        compiler_params=pltpu.CompilerParams(
            dimension_semantics=("parallel",)),
    )(x_pad, drop, w_stack, b_stack)

    z_c = zpack_p[:B, :Z_DIM]
    x_hat = xhat_p[:B, :D_IN]
    z = zpack_p[:B, :Z_DIM + 2]
    gamma = zpack_p[:B, Z_DIM + 2:Z_DIM + 2 + N_GMM]
    return z_c, x_hat, z, gamma


if __name__ == "__main__":
    key = jax.random.PRNGKey(0)
    pkey, xkey, dkey = jax.random.split(key, 3)
    params = init_params(pkey)
    x = jax.random.normal(xkey, (8, D_IN), jnp.float32)

    out = jax.block_until_ready(dagmm_forward(x, params, dkey))
    z_c, x_hat, z, gamma = out
    assert z_c.shape == (8, Z_DIM)
    assert x_hat.shape == (8, D_IN)
    assert z.shape == (8, Z_DIM + 2)
    assert gamma.shape == (8, N_GMM)
    assert bool(jnp.all(jnp.isfinite(x_hat)))
    assert bool(jnp.all(jnp.isfinite(z)))
    assert bool(jnp.all(jnp.isfinite(gamma)))
    # softmax rows sum to 1
    assert bool(jnp.allclose(jnp.sum(gamma, axis=1), 1.0, atol=1e-5))
    # z_c is the leading slice of z (packed-output consistency)
    assert bool(jnp.allclose(z[:, :Z_DIM], z_c))
    print("KERNEL_OK")
</pallas_src>

<mosaic_0001>
module attributes {stable_mosaic.version = 11 : i64} {
  func.func @_dagmm_kernel(%arg0: i32, %arg1: memref<8x128xf32, #tpu.memory_space<vmem>>, %arg2: memref<8x128xf32, #tpu.memory_space<vmem>>, %arg3: memref<10x128x128xf32, #tpu.memory_space<vmem>>, %arg4: memref<10x1x128xf32, #tpu.memory_space<vmem>>, %arg5: memref<8x128xf32, #tpu.memory_space<vmem>>, %arg6: memref<8x128xf32, #tpu.memory_space<vmem>>) attributes {dimension_semantics = [#tpu.dimension_semantics<parallel>], iteration_bounds = array<i64: 1>, scalar_prefetch = 0 : i64, scratch_operands = 0 : i64, tpu.core_type = #tpu.core_type<tc>, window_params = [{transform_indices = @transform_0, window_bounds = array<i64: 8, 128>}, {transform_indices = @transform_1, window_bounds = array<i64: 8, 128>}, {pipeline_mode = #tpu.pipeline_mode<synchronous>, transform_indices = @transform_2, window_bounds = array<i64: 10, 128, 128>}, {pipeline_mode = #tpu.pipeline_mode<synchronous>, transform_indices = @transform_3, window_bounds = array<i64: 10, 1, 128>}, {transform_indices = @transform_4, window_bounds = array<i64: 8, 128>}, {transform_indices = @transform_5, window_bounds = array<i64: 8, 128>}]} {
    %c0 = arith.constant 0 : index
    %c0_0 = arith.constant 0 : index
    %0 = vector.load %arg1[%c0, %c0_0] : memref<8x128xf32, #tpu.memory_space<vmem>>, vector<8x128xf32>
    %c0_1 = arith.constant 0 : index
    %c0_2 = arith.constant 0 : index
    %c0_3 = arith.constant 0 : index
    %1 = vector.load %arg3[%c0_1, %c0_2, %c0_3] : memref<10x128x128xf32, #tpu.memory_space<vmem>>, vector<1x128x128xf32>
    %2 = vector.shape_cast %1 : vector<1x128x128xf32> to vector<128x128xf32>
    %cst = arith.constant dense<0.000000e+00> : vector<8x128xf32>
    %3 = tpu.matmul %0, %2, %cst {dimension_numbers = #tpu.dot_dimension_numbers<[1], [0], [0], [1], [0, 0, 1, 1], [], []>} : vector<8x128xf32>, vector<128x128xf32>, vector<8x128xf32> -> vector<8x128xf32>
    %c0_4 = arith.constant 0 : index
    %c0_5 = arith.constant 0 : index
    %c0_6 = arith.constant 0 : index
    %4 = vector.load %arg4[%c0_4, %c0_5, %c0_6] : memref<10x1x128xf32, #tpu.memory_space<vmem>>, vector<1x1x128xf32>
    %5 = vector.shape_cast %4 : vector<1x1x128xf32> to vector<1x128xf32>
    %6 = vector.broadcast %5 : vector<1x128xf32> to vector<8x128xf32>
    %7 = arith.addf %3, %6 : vector<8x128xf32>
    %8 = math.tanh %7 : vector<8x128xf32>
    %c1 = arith.constant 1 : index
    %c0_7 = arith.constant 0 : index
    %c0_8 = arith.constant 0 : index
    %9 = vector.load %arg3[%c1, %c0_7, %c0_8] : memref<10x128x128xf32, #tpu.memory_space<vmem>>, vector<1x128x128xf32>
    %10 = vector.shape_cast %9 : vector<1x128x128xf32> to vector<128x128xf32>
    %cst_9 = arith.constant dense<0.000000e+00> : vector<8x128xf32>
    %11 = tpu.matmul %8, %10, %cst_9 {dimension_numbers = #tpu.dot_dimension_numbers<[1], [0], [0], [1], [0, 0, 1, 1], [], []>} : vector<8x128xf32>, vector<128x128xf32>, vector<8x128xf32> -> vector<8x128xf32>
    %c1_10 = arith.constant 1 : index
    %c0_11 = arith.constant 0 : index
    %c0_12 = arith.constant 0 : index
    %12 = vector.load %arg4[%c1_10, %c0_11, %c0_12] : memref<10x1x128xf32, #tpu.memory_space<vmem>>, vector<1x1x128xf32>
    %13 = vector.shape_cast %12 : vector<1x1x128xf32> to vector<1x128xf32>
    %14 = vector.broadcast %13 : vector<1x128xf32> to vector<8x128xf32>
    %15 = arith.addf %11, %14 : vector<8x128xf32>
    %16 = math.tanh %15 : vector<8x128xf32>
    %c2 = arith.constant 2 : index
    %c0_13 = arith.constant 0 : index
    %c0_14 = arith.constant 0 : index
    %17 = vector.load %arg3[%c2, %c0_13, %c0_14] : memref<10x128x128xf32, #tpu.memory_space<vmem>>, vector<1x128x128xf32>
    %18 = vector.shape_cast %17 : vector<1x128x128xf32> to vector<128x128xf32>
    %cst_15 = arith.constant dense<0.000000e+00> : vector<8x128xf32>
    %19 = tpu.matmul %16, %18, %cst_15 {dimension_numbers = #tpu.dot_dimension_numbers<[1], [0], [0], [1], [0, 0, 1, 1], [], []>} : vector<8x128xf32>, vector<128x128xf32>, vector<8x128xf32> -> vector<8x128xf32>
    %c2_16 = arith.constant 2 : index
    %c0_17 = arith.constant 0 : index
    %c0_18 = arith.constant 0 : index
    %20 = vector.load %arg4[%c2_16, %c0_17, %c0_18] : memref<10x1x128xf32, #tpu.memory_space<vmem>>, vector<1x1x128xf32>
    %21 = vector.shape_cast %20 : vector<1x1x128xf32> to vector<1x128xf32>
    %22 = vector.broadcast %21 : vector<1x128xf32> to vector<8x128xf32>
    %23 = arith.addf %19, %22 : vector<8x128xf32>
    %24 = math.tanh %23 : vector<8x128xf32>
    %c3 = arith.constant 3 : index
    %c0_19 = arith.constant 0 : index
    %c0_20 = arith.constant 0 : index
    %25 = vector.load %arg3[%c3, %c0_19, %c0_20] : memref<10x128x128xf32, #tpu.memory_space<vmem>>, vector<1x128x128xf32>
    %26 = vector.shape_cast %25 : vector<1x128x128xf32> to vector<128x128xf32>
    %cst_21 = arith.constant dense<0.000000e+00> : vector<8x128xf32>
    %27 = tpu.matmul %24, %26, %cst_21 {dimension_numbers = #tpu.dot_dimension_numbers<[1], [0], [0], [1], [0, 0, 1, 1], [], []>} : vector<8x128xf32>, vector<128x128xf32>, vector<8x128xf32> -> vector<8x128xf32>
    %c3_22 = arith.constant 3 : index
    %c0_23 = arith.constant 0 : index
    %c0_24 = arith.constant 0 : index
    %28 = vector.load %arg4[%c3_22, %c0_23, %c0_24] : memref<10x1x128xf32, #tpu.memory_space<vmem>>, vector<1x1x128xf32>
    %29 = vector.shape_cast %28 : vector<1x1x128xf32> to vector<1x128xf32>
    %30 = vector.broadcast %29 : vector<1x128xf32> to vector<8x128xf32>
    %31 = arith.addf %27, %30 : vector<8x128xf32>
    %c4 = arith.constant 4 : index
    %c0_25 = arith.constant 0 : index
    %c0_26 = arith.constant 0 : index
    %32 = vector.load %arg3[%c4, %c0_25, %c0_26] : memref<10x128x128xf32, #tpu.memory_space<vmem>>, vector<1x128x128xf32>
    %33 = vector.shape_cast %32 : vector<1x128x128xf32> to vector<128x128xf32>
    %cst_27 = arith.constant dense<0.000000e+00> : vector<8x128xf32>
    %34 = tpu.matmul %31, %33, %cst_27 {dimension_numbers = #tpu.dot_dimension_numbers<[1], [0], [0], [1], [0, 0, 1, 1], [], []>} : vector<8x128xf32>, vector<128x128xf32>, vector<8x128xf32> -> vector<8x128xf32>
    %c4_28 = arith.constant 4 : index
    %c0_29 = arith.constant 0 : index
    %c0_30 = arith.constant 0 : index
    %35 = vector.load %arg4[%c4_28, %c0_29, %c0_30] : memref<10x1x128xf32, #tpu.memory_space<vmem>>, vector<1x1x128xf32>
    %36 = vector.shape_cast %35 : vector<1x1x128xf32> to vector<1x128xf32>
    %37 = vector.broadcast %36 : vector<1x128xf32> to vector<8x128xf32>
    %38 = arith.addf %34, %37 : vector<8x128xf32>
    %39 = math.tanh %38 : vector<8x128xf32>
    %c5 = arith.constant 5 : index
    %c0_31 = arith.constant 0 : index
    %c0_32 = arith.constant 0 : index
    %40 = vector.load %arg3[%c5, %c0_31, %c0_32] : memref<10x128x128xf32, #tpu.memory_space<vmem>>, vector<1x128x128xf32>
    %41 = vector.shape_cast %40 : vector<1x128x128xf32> to vector<128x128xf32>
    %cst_33 = arith.constant dense<0.000000e+00> : vector<8x128xf32>
    %42 = tpu.matmul %39, %41, %cst_33 {dimension_numbers = #tpu.dot_dimension_numbers<[1], [0], [0], [1], [0, 0, 1, 1], [], []>} : vector<8x128xf32>, vector<128x128xf32>, vector<8x128xf32> -> vector<8x128xf32>
    %c5_34 = arith.constant 5 : index
    %c0_35 = arith.constant 0 : index
    %c0_36 = arith.constant 0 : index
    %43 = vector.load %arg4[%c5_34, %c0_35, %c0_36] : memref<10x1x128xf32, #tpu.memory_space<vmem>>, vector<1x1x128xf32>
    %44 = vector.shape_cast %43 : vector<1x1x128xf32> to vector<1x128xf32>
    %45 = vector.broadcast %44 : vector<1x128xf32> to vector<8x128xf32>
    %46 = arith.addf %42, %45 : vector<8x128xf32>
    %47 = math.tanh %46 : vector<8x128xf32>
    %c6 = arith.constant 6 : index
    %c0_37 = arith.constant 0 : index
    %c0_38 = arith.constant 0 : index
    %48 = vector.load %arg3[%c6, %c0_37, %c0_38] : memref<10x128x128xf32, #tpu.memory_space<vmem>>, vector<1x128x128xf32>
    %49 = vector.shape_cast %48 : vector<1x128x128xf32> to vector<128x128xf32>
    %cst_39 = arith.constant dense<0.000000e+00> : vector<8x128xf32>
    %50 = tpu.matmul %47, %49, %cst_39 {dimension_numbers = #tpu.dot_dimension_numbers<[1], [0], [0], [1], [0, 0, 1, 1], [], []>} : vector<8x128xf32>, vector<128x128xf32>, vector<8x128xf32> -> vector<8x128xf32>
    %c6_40 = arith.constant 6 : index
    %c0_41 = arith.constant 0 : index
    %c0_42 = arith.constant 0 : index
    %51 = vector.load %arg4[%c6_40, %c0_41, %c0_42] : memref<10x1x128xf32, #tpu.memory_space<vmem>>, vector<1x1x128xf32>
    %52 = vector.shape_cast %51 : vector<1x1x128xf32> to vector<1x128xf32>
    %53 = vector.broadcast %52 : vector<1x128xf32> to vector<8x128xf32>
    %54 = arith.addf %50, %53 : vector<8x128xf32>
    %55 = math.tanh %54 : vector<8x128xf32>
    %c7 = arith.constant 7 : index
    %c0_43 = arith.constant 0 : index
    %c0_44 = arith.constant 0 : index
    %56 = vector.load %arg3[%c7, %c0_43, %c0_44] : memref<10x128x128xf32, #tpu.memory_space<vmem>>, vector<1x128x128xf32>
    %57 = vector.shape_cast %56 : vector<1x128x128xf32> to vector<128x128xf32>
    %cst_45 = arith.constant dense<0.000000e+00> : vector<8x128xf32>
    %58 = tpu.matmul %55, %57, %cst_45 {dimension_numbers = #tpu.dot_dimension_numbers<[1], [0], [0], [1], [0, 0, 1, 1], [], []>} : vector<8x128xf32>, vector<128x128xf32>, vector<8x128xf32> -> vector<8x128xf32>
    %c7_46 = arith.constant 7 : index
    %c0_47 = arith.constant 0 : index
    %c0_48 = arith.constant 0 : index
    %59 = vector.load %arg4[%c7_46, %c0_47, %c0_48] : memref<10x1x128xf32, #tpu.memory_space<vmem>>, vector<1x1x128xf32>
    %60 = vector.shape_cast %59 : vector<1x1x128xf32> to vector<1x128xf32>
    %61 = vector.broadcast %60 : vector<1x128xf32> to vector<8x128xf32>
    %62 = arith.addf %58, %61 : vector<8x128xf32>
    %63 = arith.mulf %0, %0 : vector<8x128xf32>
    %cst_49 = arith.constant dense<0.000000e+00> : vector<8xf32>
    %64 = vector.multi_reduction <add>, %63, %cst_49 [1] : vector<8x128xf32> to vector<8xf32>
    %65 = vector.shape_cast %64 : vector<8xf32> to vector<8x1xf32>
    %66 = arith.mulf %62, %62 : vector<8x128xf32>
    %cst_50 = arith.constant dense<0.000000e+00> : vector<8xf32>
    %67 = vector.multi_reduction <add>, %66, %cst_50 [1] : vector<8x128xf32> to vector<8xf32>
    %68 = vector.shape_cast %67 : vector<8xf32> to vector<8x1xf32>
    %69 = arith.mulf %0, %62 : vector<8x128xf32>
    %cst_51 = arith.constant dense<0.000000e+00> : vector<8xf32>
    %70 = vector.multi_reduction <add>, %69, %cst_51 [1] : vector<8x128xf32> to vector<8xf32>
    %71 = vector.shape_cast %70 : vector<8xf32> to vector<8x1xf32>
    %cst_52 = arith.constant 2.000000e+00 : f32
    %72 = vector.broadcast %cst_52 : f32 to vector<8x1xf32>
    %73 = arith.mulf %72, %71 : vector<8x1xf32>
    %74 = arith.subf %65, %73 : vector<8x1xf32>
    %75 = arith.addf %74, %68 : vector<8x1xf32>
    %cst_53 = arith.constant 0.000000e+00 : f32
    %76 = vector.broadcast %cst_53 : f32 to vector<8x1xf32>
    %77 = arith.maximumf %75, %76 : vector<8x1xf32>
    %78 = math.sqrt %65 : vector<8x1xf32>
    %79 = math.sqrt %68 : vector<8x1xf32>
    %cst_54 = arith.constant 0.000000e+00 : f32
    %80 = vector.broadcast %cst_54 : f32 to vector<8x1xf32>
    %81 = arith.cmpf ogt, %65, %80 : vector<8x1xf32>
    %cst_55 = arith.constant 1.000000e+00 : f32
    %82 = vector.broadcast %cst_55 : f32 to vector<8x1xf32>
    %83 = arith.select %81, %78, %82 : vector<8x1xi1>, vector<8x1xf32>
    %84 = math.sqrt %77 : vector<8x1xf32>
    %85 = arith.divf %84, %83 : vector<8x1xf32>
    %cst_56 = arith.constant 9.99999993E-9 : f32
    %86 = vector.broadcast %cst_56 : f32 to vector<8x1xf32>
    %87 = arith.maximumf %78, %86 : vector<8x1xf32>
    %cst_57 = arith.constant 9.99999993E-9 : f32
    %88 = vector.broadcast %cst_57 : f32 to vector<8x1xf32>
    %89 = arith.maximumf %79, %88 : vector<8x1xf32>
    %90 = arith.mulf %87, %89 : vector<8x1xf32>
    %91 = arith.divf %71, %90 : vector<8x1xf32>
    %92 = tpu.iota {dimensions = array<i32: 1>} : vector<8x128xi32>
    %c1_i32 = arith.constant 1 : i32
    %93 = vector.broadcast %c1_i32 : i32 to vector<8x128xi32>
    %94 = arith.cmpi slt, %92, %93 : vector<8x128xi32>
    %cst_58 = arith.constant 0.000000e+00 : f32
    %95 = vector.broadcast %cst_58 : f32 to vector<8x128xf32>
    %96 = arith.select %94, %31, %95 : vector<8x128xi1>, vector<8x128xf32>
    %c1_i32_59 = arith.constant 1 : i32
    %97 = vector.broadcast %c1_i32_59 : i32 to vector<8x128xi32>
    %98 = arith.cmpi eq, %92, %97 : vector<8x128xi32>
    %99 = vector.shape_cast %85 : vector<8x1xf32> to vector<8x1xf32>
    %100 = vector.broadcast %99 : vector<8x1xf32> to vector<8x128xf32>
    %101 = arith.select %98, %100, %96 : vector<8x128xi1>, vector<8x128xf32>
    %c2_i32 = arith.constant 2 : i32
    %102 = vector.broadcast %c2_i32 : i32 to vector<8x128xi32>
    %103 = arith.cmpi eq, %92, %102 : vector<8x128xi32>
    %104 = vector.shape_cast %91 : vector<8x1xf32> to vector<8x1xf32>
    %105 = vector.broadcast %104 : vector<8x1xf32> to vector<8x128xf32>
    %106 = arith.select %103, %105, %101 : vector<8x128xi1>, vector<8x128xf32>
    %c8 = arith.constant 8 : index
    %c0_60 = arith.constant 0 : index
    %c0_61 = arith.constant 0 : index
    %107 = vector.load %arg3[%c8, %c0_60, %c0_61] : memref<10x128x128xf32, #tpu.memory_space<vmem>>, vector<1x128x128xf32>
    %108 = vector.shape_cast %107 : vector<1x128x128xf32> to vector<128x128xf32>
    %cst_62 = arith.constant dense<0.000000e+00> : vector<8x128xf32>
    %109 = tpu.matmul %106, %108, %cst_62 {dimension_numbers = #tpu.dot_dimension_numbers<[1], [0], [0], [1], [0, 0, 1, 1], [], []>} : vector<8x128xf32>, vector<128x128xf32>, vector<8x128xf32> -> vector<8x128xf32>
    %c8_63 = arith.constant 8 : index
    %c0_64 = arith.constant 0 : index
    %c0_65 = arith.constant 0 : index
    %110 = vector.load %arg4[%c8_63, %c0_64, %c0_65] : memref<10x1x128xf32, #tpu.memory_space<vmem>>, vector<1x1x128xf32>
    %111 = vector.shape_cast %110 : vector<1x1x128xf32> to vector<1x128xf32>
    %112 = vector.broadcast %111 : vector<1x128xf32> to vector<8x128xf32>
    %113 = arith.addf %109, %112 : vector<8x128xf32>
    %114 = math.tanh %113 : vector<8x128xf32>
    %c0_66 = arith.constant 0 : index
    %c0_67 = arith.constant 0 : index
    %115 = vector.load %arg2[%c0_66, %c0_67] : memref<8x128xf32, #tpu.memory_space<vmem>>, vector<8x128xf32>
    %116 = arith.mulf %114, %115 : vector<8x128xf32>
    %c9 = arith.constant 9 : index
    %c0_68 = arith.constant 0 : index
    %c0_69 = arith.constant 0 : index
    %117 = vector.load %arg3[%c9, %c0_68, %c0_69] : memref<10x128x128xf32, #tpu.memory_space<vmem>>, vector<1x128x128xf32>
    %118 = vector.shape_cast %117 : vector<1x128x128xf32> to vector<128x128xf32>
    %cst_70 = arith.constant dense<0.000000e+00> : vector<8x128xf32>
    %119 = tpu.matmul %116, %118, %cst_70 {dimension_numbers = #tpu.dot_dimension_numbers<[1], [0], [0], [1], [0, 0, 1, 1], [], []>} : vector<8x128xf32>, vector<128x128xf32>, vector<8x128xf32> -> vector<8x128xf32>
    %c9_71 = arith.constant 9 : index
    %c0_72 = arith.constant 0 : index
    %c0_73 = arith.constant 0 : index
    %120 = vector.load %arg4[%c9_71, %c0_72, %c0_73] : memref<10x1x128xf32, #tpu.memory_space<vmem>>, vector<1x1x128xf32>
    %121 = vector.shape_cast %120 : vector<1x1x128xf32> to vector<1x128xf32>
    %122 = vector.broadcast %121 : vector<1x128xf32> to vector<8x128xf32>
    %123 = arith.addf %119, %122 : vector<8x128xf32>
    %c3_i32 = arith.constant 3 : i32
    %124 = vector.broadcast %c3_i32 : i32 to vector<8x128xi32>
    %125 = arith.cmpi sge, %92, %124 : vector<8x128xi32>
    %c5_i32 = arith.constant 5 : i32
    %126 = vector.broadcast %c5_i32 : i32 to vector<8x128xi32>
    %127 = arith.cmpi slt, %92, %126 : vector<8x128xi32>
    %128 = arith.andi %125, %127 : vector<8x128xi1>
    %cst_74 = arith.constant -1.000000e+30 : f32
    %129 = vector.broadcast %cst_74 : f32 to vector<8x128xf32>
    %130 = arith.select %128, %123, %129 : vector<8x128xi1>, vector<8x128xf32>
    %cst_75 = arith.constant dense<0xFF800000> : vector<8xf32>
    %131 = vector.multi_reduction <maximumf>, %130, %cst_75 [1] : vector<8x128xf32> to vector<8xf32>
    %132 = vector.shape_cast %131 : vector<8xf32> to vector<8x1xf32>
    %133 = vector.broadcast %132 : vector<8x1xf32> to vector<8x128xf32>
    %134 = arith.subf %130, %133 : vector<8x128xf32>
    %135 = math.exp %134 : vector<8x128xf32>
    %cst_76 = arith.constant dense<0.000000e+00> : vector<8xf32>
    %136 = vector.multi_reduction <add>, %135, %cst_76 [1] : vector<8x128xf32> to vector<8xf32>
    %137 = vector.shape_cast %136 : vector<8xf32> to vector<8x1xf32>
    %138 = vector.broadcast %137 : vector<8x1xf32> to vector<8x128xf32>
    %139 = arith.divf %135, %138 : vector<8x128xf32>
    %c0_77 = arith.constant 0 : index
    %c0_78 = arith.constant 0 : index
    %140 = vector.load %arg5[%c0_77, %c0_78] : memref<8x128xf32, #tpu.memory_space<vmem>>, vector<8x128xf32>
    tpu.vector_store %arg5[%c0_77, %c0_78], %62 {strides = array<i32>} : memref<8x128xf32, #tpu.memory_space<vmem>>, vector<8x128xf32>,
    %141 = arith.addf %106, %139 : vector<8x128xf32>
    %c0_79 = arith.constant 0 : index
    %c0_80 = arith.constant 0 : index
    %142 = vector.load %arg6[%c0_79, %c0_80] : memref<8x128xf32, #tpu.memory_space<vmem>>, vector<8x128xf32>
    tpu.vector_store %arg6[%c0_79, %c0_80], %141 {strides = array<i32>} : memref<8x128xf32, #tpu.memory_space<vmem>>, vector<8x128xf32>,
    return
  }
  func.func @transform_0(%arg0: i32) -> (i32, i32) {
    %c0_i32 = arith.constant 0 : i32
    %c0_i32_0 = arith.constant 0 : i32
    return %arg0, %c0_i32 : i32, i32
  }
  func.func @transform_1(%arg0: i32) -> (i32, i32) {
    %c0_i32 = arith.constant 0 : i32
    %c0_i32_0 = arith.constant 0 : i32
    return %arg0, %c0_i32 : i32, i32
  }
  func.func @transform_2(%arg0: i32) -> (i32, i32, i32) {
    %c0_i32 = arith.constant 0 : i32
    %c0_i32_0 = arith.constant 0 : i32
    %c0_i32_1 = arith.constant 0 : i32
    %c0_i32_2 = arith.constant 0 : i32
    return %c0_i32, %c0_i32_0, %c0_i32_1 : i32, i32, i32
  }
  func.func @transform_3(%arg0: i32) -> (i32, i32, i32) {
    %c0_i32 = arith.constant 0 : i32
    %c0_i32_0 = arith.constant 0 : i32
    %c0_i32_1 = arith.constant 0 : i32
    %c0_i32_2 = arith.constant 0 : i32
    return %c0_i32, %c0_i32_0, %c0_i32_1 : i32, i32, i32
  }
  func.func @transform_4(%arg0: i32) -> (i32, i32) {
    %c0_i32 = arith.constant 0 : i32
    %c0_i32_0 = arith.constant 0 : i32
    return %arg0, %c0_i32 : i32, i32
  }
  func.func @transform_5(%arg0: i32) -> (i32, i32) {
    %c0_i32 = arith.constant 0 : i32
    %c0_i32_0 = arith.constant 0 : i32
    return %arg0, %c0_i32 : i32, i32
  }
}

</mosaic_0001>

<llo_original>
// kernel: tpu_custom_call.1
$region0: #{tpu_custom_call.1}
  #allocation0 [shape = 'u32[]', space=smem, size = 0x4, offset = 0x4, fixed_abs, tag = 'smem constant byte address 0x4 - core index']
  #allocation1 [shape = 'u32[72,128]{1,0:T(1,128)}', space=vmem, size = 0x9000, scoped, tag = 'internal scratch']
  %s0 = inlined_call_operand.hbm [shape: f32[8,128], index: 0, kind: input, shape index: {}]
  %s1 = inlined_call_operand.hbm [shape: f32[8,128], index: 1, kind: input, shape index: {}]
  %s2 = inlined_call_operand.hbm [shape: f32[10,128,128], index: 2, kind: input, shape index: {}]
  %s3 = inlined_call_operand.hbm [shape: f32[10,1,128], index: 3, kind: input, shape index: {}]
  %s4 = inlined_call_operand.hbm [shape: f32[8,128], index: 4, kind: output, shape index: {0}]
  %s5 = inlined_call_operand.hbm [shape: f32[8,128], index: 5, kind: output, shape index: {1}]
  %6 = xla_tuple %s4, %s5
  %s7 = sld [smem:[#allocation0]]
  $region50: #{tpu_custom_call.1} parent=0
    _
  %s9 = ssub.s32 1, %s7
  %s10 = scalar_select 0, %s9, %s7
  $region1: #{tpu_custom_call.1} parent=0
    #allocation2 [shape = 'u8[4096]{0}', space=vmem, size = 0x1000, scoped, tag = 'input window, operand 0, single buffered']
    #allocation3 [shape = 's32[1]{0}', space=sflag, size = 0x4, scoped, tag = 'scoped memory for tpu_custom_call.1']
    #allocation4 [shape = 's32[1]{0}', space=sflag, size = 0x4, scoped, tag = 'scoped memory for tpu_custom_call.1']
    #allocation5 [shape = 'u8[4096]{0}', space=vmem, size = 0x1000, scoped, tag = 'input window, operand 1, single buffered']
    #allocation6 [shape = 's32[1]{0}', space=sflag, size = 0x4, scoped, tag = 'scoped memory for tpu_custom_call.1']
    #allocation7 [shape = 'u8[655360]{0}', space=vmem, size = 0xa0000, scoped, tag = 'input window, operand 2, single buffered']
    #allocation8 [shape = 'u8[5120]{0}', space=vmem, size = 0x1400, scoped, tag = 'input window, operand 3, single buffered']
    #allocation9 [shape = 's32[1]{0}', space=sflag, size = 0x4, scoped, tag = 'scoped memory for tpu_custom_call.1']
    #allocation10 [shape = 'u8[4096]{0}', space=vmem, size = 0x1000, scoped, tag = 'output window, operand 0, single buffered']
    #allocation11 [shape = 'u8[4096]{0}', space=vmem, size = 0x1000, scoped, tag = 'output window, operand 1, single buffered']
    #allocation12 [shape = 's32[1]{0}', space=sflag, size = 0x4, scoped, tag = 'scoped memory for tpu_custom_call.1']
    %11 = vsyncpa [#allocation3], 0
    %12 = vsyncpa [#allocation6], 0
    %13 = vsyncpa [#allocation9], 0
    %14 = vsyncpa [#allocation4], 0
    %15 = vsyncpa [#allocation12], 0
    // Predicated region
    $region2: #{tpu_custom_call.1} parent=1 // pred_check
      _
    $region3: #{tpu_custom_call.1} parent=1 // pred_check_branch
      %17 = sbr.rel (0) target = $region5
    $region4: #{tpu_custom_call.1} parent=1 // pred_region
      %19 = vsyncadd [#allocation3], 0
      %s21 = sshll.u32 %s0, 4
      %s22 = int_to_ptr.hbm [resolvable:$true] %s21
      %s23 = sshll.u32 [#allocation2], 4
      %s24 = int_to_ptr.vmem [resolvable:$true] %s23
      %26 = dma.hbm_to_vmem [thread:$0]  %s22, 128, %s24, [#allocation3]
    $region5: #{tpu_custom_call.1} parent=1 // pred_fallthru
      _
    // Predicated region
    $region6: #{tpu_custom_call.1} parent=1 // pred_check
      _
    $region7: #{tpu_custom_call.1} parent=1 // pred_check_branch
      %28 = sbr.rel (0) target = $region9
    $region8: #{tpu_custom_call.1} parent=1 // pred_region
      %30 = vsyncadd [#allocation6], 0
      %s32 = sshll.u32 %s1, 4
      %s33 = int_to_ptr.hbm [resolvable:$true] %s32
      %s34 = sshll.u32 [#allocation5], 4
      %s35 = int_to_ptr.vmem [resolvable:$true] %s34
      %37 = dma.hbm_to_vmem [thread:$0]  %s33, 128, %s35, [#allocation6]
    $region9: #{tpu_custom_call.1} parent=1 // pred_fallthru
      _
    // Predicated region
    $region10: #{tpu_custom_call.1} parent=1 // pred_check
      _
    $region11: #{tpu_custom_call.1} parent=1 // pred_check_branch
      %39 = sbr.rel (0) target = $region13
    $region12: #{tpu_custom_call.1} parent=1 // pred_region
      %41 = vsyncadd [#allocation6], 0
      %s42 = sshll.u32 %s2, 4
      %s43 = int_to_ptr.hbm [resolvable:$true] %s42
      %s44 = sshll.u32 [#allocation7], 4
      %s45 = int_to_ptr.vmem [resolvable:$true] %s44
      %50 = dma.hbm_to_vmem [thread:$0]  %s43, 20480, %s45, [#allocation6], 128, 128, 8
    $region13: #{tpu_custom_call.1} parent=1 // pred_fallthru
      _
    // Predicated region
    $region14: #{tpu_custom_call.1} parent=1 // pred_check
      _
    $region15: #{tpu_custom_call.1} parent=1 // pred_check_branch
      %52 = sbr.rel (0) target = $region17
    $region16: #{tpu_custom_call.1} parent=1 // pred_region
      %54 = vsyncadd [#allocation9], 0
      %s55 = sshll.u32 %s3, 4
      %s56 = int_to_ptr.hbm [resolvable:$true] %s55
      %s57 = sshll.u32 [#allocation8], 4
      %s58 = int_to_ptr.vmem [resolvable:$true] %s57
      %63 = dma.hbm_to_vmem [thread:$0]  %s56, 160, %s58, [#allocation9], 16, 16, 1
    $region17: #{tpu_custom_call.1} parent=1 // pred_fallthru
      _
    // Predicated region
    $region18: #{tpu_custom_call.1} parent=1 // pred_check
      _
    $region19: #{tpu_custom_call.1} parent=1 // pred_check_branch
      %65 = sbr.rel (0) target = $region21
    $region20: #{tpu_custom_call.1} parent=1 // pred_region
      %67 = dma.done [#allocation3], 128
    $region21: #{tpu_custom_call.1} parent=1 // pred_fallthru
      _
    // Predicated region
    $region22: #{tpu_custom_call.1} parent=1 // pred_check
      _
    $region23: #{tpu_custom_call.1} parent=1 // pred_check_branch
      %69 = sbr.rel (0) target = $region25
    $region24: #{tpu_custom_call.1} parent=1 // pred_region
      %71 = dma.done [#allocation6], 128
    $region25: #{tpu_custom_call.1} parent=1 // pred_fallthru
      _
    // Predicated region
    $region26: #{tpu_custom_call.1} parent=1 // pred_check
      _
    $region27: #{tpu_custom_call.1} parent=1 // pred_check_branch
      %73 = sbr.rel (0) target = $region29
    $region28: #{tpu_custom_call.1} parent=1 // pred_region
      %75 = dma.done [#allocation6], 20480
    $region29: #{tpu_custom_call.1} parent=1 // pred_fallthru
      _
    // Predicated region
    $region30: #{tpu_custom_call.1} parent=1 // pred_check
      _
    $region31: #{tpu_custom_call.1} parent=1 // pred_check_branch
      %77 = sbr.rel (0) target = $region33
    $region32: #{tpu_custom_call.1} parent=1 // pred_region
      %79 = dma.done [#allocation9], 160
    $region33: #{tpu_custom_call.1} parent=1 // pred_fallthru
      _
    %v80 = vld [vmem:[#allocation2] sm:$0xff]
    %v81 = vld [vmem:[#allocation7] sm:$0xff]
    %v82 = vld [vmem:[#allocation7 + $0x8] sm:$0xff]
    %v83 = vld [vmem:[#allocation7 + $0x10] sm:$0xff]
    %v84 = vld [vmem:[#allocation7 + $0x18] sm:$0xff]
    %v85 = vld [vmem:[#allocation7 + $0x20] sm:$0xff]
    %v86 = vld [vmem:[#allocation7 + $0x28] sm:$0xff]
    %v87 = vld [vmem:[#allocation7 + $0x30] sm:$0xff]
    %v88 = vld [vmem:[#allocation7 + $0x38] sm:$0xff]
    %v89 = vld [vmem:[#allocation7 + $0x40] sm:$0xff]
    %v90 = vld [vmem:[#allocation7 + $0x48] sm:$0xff]
    %v91 = vld [vmem:[#allocation7 + $0x50] sm:$0xff]
    %v92 = vld [vmem:[#allocation7 + $0x58] sm:$0xff]
    %v93 = vld [vmem:[#allocation7 + $0x60] sm:$0xff]
    %v94 = vld [vmem:[#allocation7 + $0x68] sm:$0xff]
    %v95 = vld [vmem:[#allocation7 + $0x70] sm:$0xff]
    %v96 = vld [vmem:[#allocation7 + $0x78] sm:$0xff]
    %v97 = vld [vmem:[#allocation8] sm:$0x1]
    %v99 = vperm.slane %v97, 0
    %101 = vmatpush.msra.mxu0 %v96
    %102 = vmatpush.msra.mxu0 %v95
    %103 = vmatpush.msra.mxu0 %v94
    %104 = vmatpush.msra.mxu0 %v93
    %105 = vmatpush.msra.mxu0 %v92
    %106 = vmatpush.msra.mxu0 %v91
    %107 = vmatpush.msra.mxu0 %v90
    %108 = vmatpush.msra.mxu0 %v89
    %109 = vmatpush.msra.mxu0 %v88
    %110 = vmatpush.msra.mxu0 %v87
    %111 = vmatpush.msra.mxu0 %v86
    %112 = vmatpush.msra.mxu0 %v85
    %113 = vmatpush.msra.mxu0 %v84
    %114 = vmatpush.msra.mxu0 %v83
    %115 = vmatpush.msra.mxu0 %v82
    %116 = vmatpush.msra.mxu0 %v81
    %117 = vmatmul.f32.gmra.mxu0 %v80
    %v118 = vpop.f32.mrf.mxu0
    %v119 = vadd.f32 %v99, %v118
    %120 = vdwg.mxu0
    %v121 = vtanh.pop %v119
    %s122 = scalar_lea.vmem [#allocation7], 128
    %v123 = vld [vmem:[%s122] sm:$0xff]
    %v124 = vld [vmem:[%s122 + $0x8] sm:$0xff]
    %v125 = vld [vmem:[%s122 + $0x10] sm:$0xff]
    %v126 = vld [vmem:[%s122 + $0x18] sm:$0xff]
    %v127 = vld [vmem:[%s122 + $0x20] sm:$0xff]
    %v128 = vld [vmem:[%s122 + $0x28] sm:$0xff]
    %v129 = vld [vmem:[%s122 + $0x30] sm:$0xff]
    %v130 = vld [vmem:[%s122 + $0x38] sm:$0xff]
    %v131 = vld [vmem:[%s122 + $0x40] sm:$0xff]
    %v132 = vld [vmem:[%s122 + $0x48] sm:$0xff]
    %v133 = vld [vmem:[%s122 + $0x50] sm:$0xff]
    %v134 = vld [vmem:[%s122 + $0x58] sm:$0xff]
    %v135 = vld [vmem:[%s122 + $0x60] sm:$0xff]
    %v136 = vld [vmem:[%s122 + $0x68] sm:$0xff]
    %v137 = vld [vmem:[%s122 + $0x70] sm:$0xff]
    %v138 = vld [vmem:[%s122 + $0x78] sm:$0xff]
    %s139 = scalar_lea.vmem [#allocation8], 1
    %v140 = vld [vmem:[%s139] sm:$0x1]
    %v142 = vperm.slane %v140, 0
    %144 = vmatpush.msra.mxu0 %v138
    %145 = vmatpush.msra.mxu0 %v137
    %146 = vmatpush.msra.mxu0 %v136
    %147 = vmatpush.msra.mxu0 %v135
    %148 = vmatpush.msra.mxu0 %v134
    %149 = vmatpush.msra.mxu0 %v133
    %150 = vmatpush.msra.mxu0 %v132
    %151 = vmatpush.msra.mxu0 %v131
    %152 = vmatpush.msra.mxu0 %v130
    %153 = vmatpush.msra.mxu0 %v129
    %154 = vmatpush.msra.mxu0 %v128
    %155 = vmatpush.msra.mxu0 %v127
    %156 = vmatpush.msra.mxu0 %v126
    %157 = vmatpush.msra.mxu0 %v125
    %158 = vmatpush.msra.mxu0 %v124
    %159 = vmatpush.msra.mxu0 %v123
    %160 = vmatmul.f32.gmra.mxu0 %v121
    %v161 = vpop.f32.mrf.mxu0
    %v162 = vadd.f32 %v142, %v161
    %163 = vdwg.mxu0
    %v164 = vtanh.pop %v162
    %s165 = scalar_lea.vmem [#allocation7], 256
    %v166 = vld [vmem:[%s165] sm:$0xff]
    %v167 = vld [vmem:[%s165 + $0x8] sm:$0xff]
    %v168 = vld [vmem:[%s165 + $0x10] sm:$0xff]
    %v169 = vld [vmem:[%s165 + $0x18] sm:$0xff]
    %v170 = vld [vmem:[%s165 + $0x20] sm:$0xff]
    %v171 = vld [vmem:[%s165 + $0x28] sm:$0xff]
    %v172 = vld [vmem:[%s165 + $0x30] sm:$0xff]
    %v173 = vld [vmem:[%s165 + $0x38] sm:$0xff]
    %v174 = vld [vmem:[%s165 + $0x40] sm:$0xff]
    %v175 = vld [vmem:[%s165 + $0x48] sm:$0xff]
    %v176 = vld [vmem:[%s165 + $0x50] sm:$0xff]
    %v177 = vld [vmem:[%s165 + $0x58] sm:$0xff]
    %v178 = vld [vmem:[%s165 + $0x60] sm:$0xff]
    %v179 = vld [vmem:[%s165 + $0x68] sm:$0xff]
    %v180 = vld [vmem:[%s165 + $0x70] sm:$0xff]
    %v181 = vld [vmem:[%s165 + $0x78] sm:$0xff]
    %s182 = scalar_lea.vmem [#allocation8], 2
    %v183 = vld [vmem:[%s182] sm:$0x1]
    %v185 = vperm.slane %v183, 0
    %187 = vmatpush.msra.mxu0 %v181
    %188 = vmatpush.msra.mxu0 %v180
    %189 = vmatpush.msra.mxu0 %v179
    %190 = vmatpush.msra.mxu0 %v178
    %191 = vmatpush.msra.mxu0 %v177
    %192 = vmatpush.msra.mxu0 %v176
    %193 = vmatpush.msra.mxu0 %v175
    %194 = vmatpush.msra.mxu0 %v174
    %195 = vmatpush.msra.mxu0 %v173
    %196 = vmatpush.msra.mxu0 %v172
    %197 = vmatpush.msra.mxu0 %v171
    %198 = vmatpush.msra.mxu0 %v170
    %199 = vmatpush.msra.mxu0 %v169
    %200 = vmatpush.msra.mxu0 %v168
    %201 = vmatpush.msra.mxu0 %v167
    %202 = vmatpush.msra.mxu0 %v166
    %203 = vmatmul.f32.gmra.mxu0 %v164
    %v204 = vpop.f32.mrf.mxu0
    %v205 = vadd.f32 %v185, %v204
    %206 = vdwg.mxu0
    %v207 = vtanh.pop %v205
    %s208 = scalar_lea.vmem [#allocation7], 384
    %v209 = vld [vmem:[%s208] sm:$0xff]
    %v210 = vld [vmem:[%s208 + $0x8] sm:$0xff]
    %v211 = vld [vmem:[%s208 + $0x10] sm:$0xff]
    %v212 = vld [vmem:[%s208 + $0x18] sm:$0xff]
    %v213 = vld [vmem:[%s208 + $0x20] sm:$0xff]
    %v214 = vld [vmem:[%s208 + $0x28] sm:$0xff]
    %v215 = vld [vmem:[%s208 + $0x30] sm:$0xff]
    %v216 = vld [vmem:[%s208 + $0x38] sm:$0xff]
    %v217 = vld [vmem:[%s208 + $0x40] sm:$0xff]
    %v218 = vld [vmem:[%s208 + $0x48] sm:$0xff]
    %v219 = vld [vmem:[%s208 + $0x50] sm:$0xff]
    %v220 = vld [vmem:[%s208 + $0x58] sm:$0xff]
    %v221 = vld [vmem:[%s208 + $0x60] sm:$0xff]
    %v222 = vld [vmem:[%s208 + $0x68] sm:$0xff]
    %v223 = vld [vmem:[%s208 + $0x70] sm:$0xff]
    %v224 = vld [vmem:[%s208 + $0x78] sm:$0xff]
    %s225 = scalar_lea.vmem [#allocation8], 3
    %v226 = vld [vmem:[%s225] sm:$0x1]
    %v228 = vperm.slane %v226, 0
    %230 = vmatpush.msra.mxu0 %v224
    %231 = vmatpush.msra.mxu0 %v223
    %232 = vmatpush.msra.mxu0 %v222
    %233 = vmatpush.msra.mxu0 %v221
    %234 = vmatpush.msra.mxu0 %v220
    %235 = vmatpush.msra.mxu0 %v219
    %236 = vmatpush.msra.mxu0 %v218
    %237 = vmatpush.msra.mxu0 %v217
    %238 = vmatpush.msra.mxu0 %v216
    %239 = vmatpush.msra.mxu0 %v215
    %240 = vmatpush.msra.mxu0 %v214
    %241 = vmatpush.msra.mxu0 %v213
    %242 = vmatpush.msra.mxu0 %v212
    %243 = vmatpush.msra.mxu0 %v211
    %244 = vmatpush.msra.mxu0 %v210
    %245 = vmatpush.msra.mxu0 %v209
    %246 = vmatmul.f32.gmra.mxu0 %v207
    %v247 = vpop.f32.mrf.mxu0
    %v248 = vadd.f32 %v228, %v247
    %249 = vdwg.mxu0
    %s250 = scalar_lea.vmem [#allocation7], 512
    %v251 = vld [vmem:[%s250] sm:$0xff]
    %v252 = vld [vmem:[%s250 + $0x8] sm:$0xff]
    %v253 = vld [vmem:[%s250 + $0x10] sm:$0xff]
    %v254 = vld [vmem:[%s250 + $0x18] sm:$0xff]
    %v255 = vld [vmem:[%s250 + $0x20] sm:$0xff]
    %v256 = vld [vmem:[%s250 + $0x28] sm:$0xff]
    %v257 = vld [vmem:[%s250 + $0x30] sm:$0xff]
    %v258 = vld [vmem:[%s250 + $0x38] sm:$0xff]
    %v259 = vld [vmem:[%s250 + $0x40] sm:$0xff]
    %v260 = vld [vmem:[%s250 + $0x48] sm:$0xff]
    %v261 = vld [vmem:[%s250 + $0x50] sm:$0xff]
    %v262 = vld [vmem:[%s250 + $0x58] sm:$0xff]
    %v263 = vld [vmem:[%s250 + $0x60] sm:$0xff]
    %v264 = vld [vmem:[%s250 + $0x68] sm:$0xff]
    %v265 = vld [vmem:[%s250 + $0x70] sm:$0xff]
    %v266 = vld [vmem:[%s250 + $0x78] sm:$0xff]
    %s267 = scalar_lea.vmem [#allocation8], 4
    %v268 = vld [vmem:[%s267] sm:$0x1]
    %v270 = vperm.slane %v268, 0
    %272 = vmatpush.msra.mxu0 %v266
    %273 = vmatpush.msra.mxu0 %v265
    %274 = vmatpush.msra.mxu0 %v264
    %275 = vmatpush.msra.mxu0 %v263
    %276 = vmatpush.msra.mxu0 %v262
    %277 = vmatpush.msra.mxu0 %v261
    %278 = vmatpush.msra.mxu0 %v260
    %279 = vmatpush.msra.mxu0 %v259
    %280 = vmatpush.msra.mxu0 %v258
    %281 = vmatpush.msra.mxu0 %v257
    %282 = vmatpush.msra.mxu0 %v256
    %283 = vmatpush.msra.mxu0 %v255
    %284 = vmatpush.msra.mxu0 %v254
    %285 = vmatpush.msra.mxu0 %v253
    %286 = vmatpush.msra.mxu0 %v252
    %287 = vmatpush.msra.mxu0 %v251
    %288 = vmatmul.f32.gmra.mxu0 %v248
    %v289 = vpop.f32.mrf.mxu0
    %v290 = vadd.f32 %v270, %v289
    %291 = vdwg.mxu0
    %v292 = vtanh.pop %v290
    %s293 = scalar_lea.vmem [#allocation7], 640
    %v294 = vld [vmem:[%s293] sm:$0xff]
    %v295 = vld [vmem:[%s293 + $0x8] sm:$0xff]
    %v296 = vld [vmem:[%s293 + $0x10] sm:$0xff]
    %v297 = vld [vmem:[%s293 + $0x18] sm:$0xff]
    %v298 = vld [vmem:[%s293 + $0x20] sm:$0xff]
    %v299 = vld [vmem:[%s293 + $0x28] sm:$0xff]
    %v300 = vld [vmem:[%s293 + $0x30] sm:$0xff]
    %v301 = vld [vmem:[%s293 + $0x38] sm:$0xff]
    %v302 = vld [vmem:[%s293 + $0x40] sm:$0xff]
    %v303 = vld [vmem:[%s293 + $0x48] sm:$0xff]
    %v304 = vld [vmem:[%s293 + $0x50] sm:$0xff]
    %v305 = vld [vmem:[%s293 + $0x58] sm:$0xff]
    %v306 = vld [vmem:[%s293 + $0x60] sm:$0xff]
    %v307 = vld [vmem:[%s293 + $0x68] sm:$0xff]
    %v308 = vld [vmem:[%s293 + $0x70] sm:$0xff]
    %v309 = vld [vmem:[%s293 + $0x78] sm:$0xff]
    %s310 = scalar_lea.vmem [#allocation8], 5
    %v311 = vld [vmem:[%s310] sm:$0x1]
    %v313 = vperm.slane %v311, 0
    %315 = vmatpush.msra.mxu0 %v309
    %316 = vmatpush.msra.mxu0 %v308
    %317 = vmatpush.msra.mxu0 %v307
    %318 = vmatpush.msra.mxu0 %v306
    %319 = vmatpush.msra.mxu0 %v305
    %320 = vmatpush.msra.mxu0 %v304
    %321 = vmatpush.msra.mxu0 %v303
    %322 = vmatpush.msra.mxu0 %v302
    %323 = vmatpush.msra.mxu0 %v301
    %324 = vmatpush.msra.mxu0 %v300
    %325 = vmatpush.msra.mxu0 %v299
    %326 = vmatpush.msra.mxu0 %v298
    %327 = vmatpush.msra.mxu0 %v297
    %328 = vmatpush.msra.mxu0 %v296
    %329 = vmatpush.msra.mxu0 %v295
    %330 = vmatpush.msra.mxu0 %v294
    %331 = vmatmul.f32.gmra.mxu0 %v292
    %v332 = vpop.f32.mrf.mxu0
    %v333 = vadd.f32 %v313, %v332
    %334 = vdwg.mxu0
    %v335 = vtanh.pop %v333
    %s336 = scalar_lea.vmem [#allocation7], 768
    %v337 = vld [vmem:[%s336] sm:$0xff]
    %v338 = vld [vmem:[%s336 + $0x8] sm:$0xff]
    %v339 = vld [vmem:[%s336 + $0x10] sm:$0xff]
    %v340 = vld [vmem:[%s336 + $0x18] sm:$0xff]
    %v341 = vld [vmem:[%s336 + $0x20] sm:$0xff]
    %v342 = vld [vmem:[%s336 + $0x28] sm:$0xff]
    %v343 = vld [vmem:[%s336 + $0x30] sm:$0xff]
    %v344 = vld [vmem:[%s336 + $0x38] sm:$0xff]
    %v345 = vld [vmem:[%s336 + $0x40] sm:$0xff]
    %v346 = vld [vmem:[%s336 + $0x48] sm:$0xff]
    %v347 = vld [vmem:[%s336 + $0x50] sm:$0xff]
    %v348 = vld [vmem:[%s336 + $0x58] sm:$0xff]
    %v349 = vld [vmem:[%s336 + $0x60] sm:$0xff]
    %v350 = vld [vmem:[%s336 + $0x68] sm:$0xff]
    %v351 = vld [vmem:[%s336 + $0x70] sm:$0xff]
    %v352 = vld [vmem:[%s336 + $0x78] sm:$0xff]
    %s353 = scalar_lea.vmem [#allocation8], 6
    %v354 = vld [vmem:[%s353] sm:$0x1]
    %v356 = vperm.slane %v354, 0
    %358 = vmatpush.msra.mxu0 %v352
    %359 = vmatpush.msra.mxu0 %v351
    %360 = vmatpush.msra.mxu0 %v350
    %361 = vmatpush.msra.mxu0 %v349
    %362 = vmatpush.msra.mxu0 %v348
    %363 = vmatpush.msra.mxu0 %v347
    %364 = vmatpush.msra.mxu0 %v346
    %365 = vmatpush.msra.mxu0 %v345
    %366 = vmatpush.msra.mxu0 %v344
    %367 = vmatpush.msra.mxu0 %v343
    %368 = vmatpush.msra.mxu0 %v342
    %369 = vmatpush.msra.mxu0 %v341
    %370 = vmatpush.msra.mxu0 %v340
    %371 = vmatpush.msra.mxu0 %v339
    %372 = vmatpush.msra.mxu0 %v338
    %373 = vmatpush.msra.mxu0 %v337
    %374 = vmatmul.f32.gmra.mxu0 %v335
    %v375 = vpop.f32.mrf.mxu0
    %v376 = vadd.f32 %v356, %v375
    %377 = vdwg.mxu0
    %v378 = vtanh.pop %v376
    %s379 = scalar_lea.vmem [#allocation7], 896
    %v380 = vld [vmem:[%s379] sm:$0xff]
    %v381 = vld [vmem:[%s379 + $0x8] sm:$0xff]
    %v382 = vld [vmem:[%s379 + $0x10] sm:$0xff]
    %v383 = vld [vmem:[%s379 + $0x18] sm:$0xff]
    %v384 = vld [vmem:[%s379 + $0x20] sm:$0xff]
    %v385 = vld [vmem:[%s379 + $0x28] sm:$0xff]
    %v386 = vld [vmem:[%s379 + $0x30] sm:$0xff]
    %v387 = vld [vmem:[%s379 + $0x38] sm:$0xff]
    %v388 = vld [vmem:[%s379 + $0x40] sm:$0xff]
    %v389 = vld [vmem:[%s379 + $0x48] sm:$0xff]
    %v390 = vld [vmem:[%s379 + $0x50] sm:$0xff]
    %v391 = vld [vmem:[%s379 + $0x58] sm:$0xff]
    %v392 = vld [vmem:[%s379 + $0x60] sm:$0xff]
    %v393 = vld [vmem:[%s379 + $0x68] sm:$0xff]
    %v394 = vld [vmem:[%s379 + $0x70] sm:$0xff]
    %v395 = vld [vmem:[%s379 + $0x78] sm:$0xff]
    %s396 = scalar_lea.vmem [#allocation8], 7
    %v397 = vld [vmem:[%s396] sm:$0x1]
    %v399 = vperm.slane %v397, 0
    %401 = vmatpush.msra.mxu0 %v395
    %402 = vmatpush.msra.mxu0 %v394
    %403 = vmatpush.msra.mxu0 %v393
    %404 = vmatpush.msra.mxu0 %v392
    %405 = vmatpush.msra.mxu0 %v391
    %406 = vmatpush.msra.mxu0 %v390
    %407 = vmatpush.msra.mxu0 %v389
    %408 = vmatpush.msra.mxu0 %v388
    %409 = vmatpush.msra.mxu0 %v387
    %410 = vmatpush.msra.mxu0 %v386
    %411 = vmatpush.msra.mxu0 %v385
    %412 = vmatpush.msra.mxu0 %v384
    %413 = vmatpush.msra.mxu0 %v383
    %414 = vmatpush.msra.mxu0 %v382
    %415 = vmatpush.msra.mxu0 %v381
    %416 = vmatpush.msra.mxu0 %v380
    %417 = vmatmul.f32.gmra.mxu0 %v378
    %v418 = vpop.f32.mrf.mxu0
    %v419 = vadd.f32 %v399, %v418
    %420 = vdwg.mxu0
    %v421 = vmul.f32 %v80, %v80
    %422 = vadd.xlane.f32.xlu0 %v421
    %v423 = vpop.xlane.xlu0 %422
    %v424 = vmul.f32 %v419, %v419
    %425 = vadd.xlane.f32.xlu0 %v424
    %v426 = vpop.xlane.xlu0 %425
    %v427 = vmul.f32 %v80, %v419
    %428 = vadd.xlane.f32.xlu0 %v427
    %v429 = vpop.xlane.xlu0 %428
    %v430 = vmul.f32 %v429, 2.0
    %v431 = vsub.f32 %v423, %v430
    %v432 = vadd.f32 %v431, %v426
    %v433 = vmax.f32 %v432, 0.0
    %v434 = vrsqrt.pop %v423
    %v435 = vmul.f32 %v434, %v423
    %v436 = vmul.f32 %v435, %v434
    %v437 = vmul.f32 0.5, %v436
    %v438 = vsub.f32 1.5, %v437
    %v439 = vmul.f32 %v434, %v438
    %v440 = vmul.f32 %v423, %v439
    %vm441 = vcmp.eq.f32.partialorder %v423, inf
    %v442 = vsel %vm441, %v423, %v440
    %vm443 = vcmp.eq.f32.partialorder %v423, 0.0
    %v444 = vand.u32 %v423, 2147483648
    %v445 = vsel %vm443, %v444, %v442
    %v446 = vrsqrt.pop %v426
    %v447 = vmul.f32 %v446, %v426
    %v448 = vmul.f32 %v447, %v446
    %v449 = vmul.f32 0.5, %v448
    %v450 = vsub.f32 1.5, %v449
    %v451 = vmul.f32 %v446, %v450
    %v452 = vmul.f32 %v426, %v451
    %vm453 = vcmp.eq.f32.partialorder %v426, inf
    %v454 = vsel %vm453, %v426, %v452
    %vm455 = vcmp.eq.f32.partialorder %v426, 0.0
    %v456 = vand.u32 %v426, 2147483648
    %v457 = vsel %vm455, %v456, %v454
    %vm458 = vcmp.gt.f32.partialorder %v423, 0.0
    %v459 = vsel %vm458, %v445, 1.0
    %v460 = vrsqrt.pop %v433
    %v461 = vmul.f32 %v460, %v433
    %v462 = vmul.f32 %v461, %v460
    %v463 = vmul.f32 0.5, %v462
    %v464 = vsub.f32 1.5, %v463
    %v465 = vmul.f32 %v460, %v464
    %v466 = vmul.f32 %v433, %v465
    %vm467 = vcmp.eq.f32.partialorder %v433, inf
    %v468 = vsel %vm467, %v433, %v466
    %vm469 = vcmp.eq.f32.partialorder %v433, 0.0
    %v470 = vand.u32 %v433, 2147483648
    %v471 = vsel %vm469, %v470, %v468
    %v472 = vrcp.pop %v459
    %v473 = vmul.f32 %v459, %v472
    %v474 = vsub.f32 1.0, %v473
    %v475 = vmul.f32 %v472, %v474
    %v476 = vadd.f32 %v472, %v475
    %vm477 = vweird.f32 %v459
    %vm478 = vweird.f32 %v472
    %vm479 = vmor %vm477, %vm478
    %v480 = vsel %vm479, %v472, %v476
    %v481 = vand.u32 2147483647, %v459
    %vm482 = vcmp.eq.f32.partialorder %v481, 8.507059e+37
    %v483 = vand.u32 %v459, 2147483648
    %v484 = vor.u32 1.1754944e-38, %v483
    %v485 = vsel %vm482, %v484, %v480
    %v486 = vmul.f32 %v471, %v485
    %v487 = vmax.f32 %v445, 1e-08
    %v488 = vmax.f32 %v457, 1e-08
    %v489 = vmul.f32 %v487, %v488
    %v490 = vrcp.pop %v489
    %v491 = vmul.f32 %v489, %v490
    %v492 = vsub.f32 1.0, %v491
    %v493 = vmul.f32 %v490, %v492
    %v494 = vadd.f32 %v490, %v493
    %vm495 = vweird.f32 %v489
    %vm496 = vweird.f32 %v490
    %vm497 = vmor %vm495, %vm496
    %v498 = vsel %vm497, %v490, %v494
    %v499 = vand.u32 2147483647, %v489
    %vm500 = vcmp.eq.f32.partialorder %v499, 8.507059e+37
    %v501 = vand.u32 %v489, 2147483648
    %v502 = vor.u32 1.1754944e-38, %v501
    %v503 = vsel %vm500, %v502, %v498
    %v504 = vmul.f32 %v429, %v503
    %v505 = vlaneseq
    %v506 = vand.u32 %v505, 127
    %vm507 = vcmp.lt.s32.totalorder %v506, 1
    %v508 = vsel %vm507, %v248, 0.0
    %vm509 = vcmp.eq.s32.totalorder %v506, 1
    %v510 = vsel %vm509, %v486, %v508
    %vm511 = vcmp.eq.s32.totalorder %v506, 2
    %v512 = vsel %vm511, %v504, %v510
    %s513 = scalar_lea.vmem [#allocation7], 1024
    %v514 = vld [vmem:[%s513] sm:$0xff]
    %v515 = vld [vmem:[%s513 + $0x8] sm:$0xff]
    %v516 = vld [vmem:[%s513 + $0x10] sm:$0xff]
    %v517 = vld [vmem:[%s513 + $0x18] sm:$0xff]
    %v518 = vld [vmem:[%s513 + $0x20] sm:$0xff]
    %v519 = vld [vmem:[%s513 + $0x28] sm:$0xff]
    %v520 = vld [vmem:[%s513 + $0x30] sm:$0xff]
    %v521 = vld [vmem:[%s513 + $0x38] sm:$0xff]
    %v522 = vld [vmem:[%s513 + $0x40] sm:$0xff]
    %v523 = vld [vmem:[%s513 + $0x48] sm:$0xff]
    %v524 = vld [vmem:[%s513 + $0x50] sm:$0xff]
    %v525 = vld [vmem:[%s513 + $0x58] sm:$0xff]
    %v526 = vld [vmem:[%s513 + $0x60] sm:$0xff]
    %v527 = vld [vmem:[%s513 + $0x68] sm:$0xff]
    %v528 = vld [vmem:[%s513 + $0x70] sm:$0xff]
    %v529 = vld [vmem:[%s513 + $0x78] sm:$0xff]
    %s530 = scalar_lea.vmem [#allocation8], 8
    %v531 = vld [vmem:[%s530] sm:$0x1]
    %v533 = vperm.slane %v531, 0
    %535 = vmatpush.msra.mxu0 %v529
    %536 = vmatpush.msra.mxu0 %v528
    %537 = vmatpush.msra.mxu0 %v527
    %538 = vmatpush.msra.mxu0 %v526
    %539 = vmatpush.msra.mxu0 %v525
    %540 = vmatpush.msra.mxu0 %v524
    %541 = vmatpush.msra.mxu0 %v523
    %542 = vmatpush.msra.mxu0 %v522
    %543 = vmatpush.msra.mxu0 %v521
    %544 = vmatpush.msra.mxu0 %v520
    %545 = vmatpush.msra.mxu0 %v519
    %546 = vmatpush.msra.mxu0 %v518
    %547 = vmatpush.msra.mxu0 %v517
    %548 = vmatpush.msra.mxu0 %v516
    %549 = vmatpush.msra.mxu0 %v515
    %550 = vmatpush.msra.mxu0 %v514
    %551 = vmatmul.f32.gmra.mxu0 %v512
    %v552 = vpop.f32.mrf.mxu0
    %v553 = vadd.f32 %v533, %v552
    %554 = vdwg.mxu0
    %v555 = vtanh.pop %v553
    %v556 = vld [vmem:[#allocation5] sm:$0xff]
    %v557 = vmul.f32 %v555, %v556
    %s558 = scalar_lea.vmem [#allocation7], 1152
    %v559 = vld [vmem:[%s558] sm:$0xff]
    %v560 = vld [vmem:[%s558 + $0x8] sm:$0xff]
    %v561 = vld [vmem:[%s558 + $0x10] sm:$0xff]
    %v562 = vld [vmem:[%s558 + $0x18] sm:$0xff]
    %v563 = vld [vmem:[%s558 + $0x20] sm:$0xff]
    %v564 = vld [vmem:[%s558 + $0x28] sm:$0xff]
    %v565 = vld [vmem:[%s558 + $0x30] sm:$0xff]
    %v566 = vld [vmem:[%s558 + $0x38] sm:$0xff]
    %v567 = vld [vmem:[%s558 + $0x40] sm:$0xff]
    %v568 = vld [vmem:[%s558 + $0x48] sm:$0xff]
    %v569 = vld [vmem:[%s558 + $0x50] sm:$0xff]
    %v570 = vld [vmem:[%s558 + $0x58] sm:$0xff]
    %v571 = vld [vmem:[%s558 + $0x60] sm:$0xff]
    %v572 = vld [vmem:[%s558 + $0x68] sm:$0xff]
    %v573 = vld [vmem:[%s558 + $0x70] sm:$0xff]
    %v574 = vld [vmem:[%s558 + $0x78] sm:$0xff]
    %s575 = scalar_lea.vmem [#allocation8], 9
    %v576 = vld [vmem:[%s575] sm:$0x1]
    %v578 = vperm.slane %v576, 0
    %580 = vmatpush.msra.mxu0 %v574
    %581 = vmatpush.msra.mxu0 %v573
    %582 = vmatpush.msra.mxu0 %v572
    %583 = vmatpush.msra.mxu0 %v571
    %584 = vmatpush.msra.mxu0 %v570
    %585 = vmatpush.msra.mxu0 %v569
    %586 = vmatpush.msra.mxu0 %v568
    %587 = vmatpush.msra.mxu0 %v567
    %588 = vmatpush.msra.mxu0 %v566
    %589 = vmatpush.msra.mxu0 %v565
    %590 = vmatpush.msra.mxu0 %v564
    %591 = vmatpush.msra.mxu0 %v563
    %592 = vmatpush.msra.mxu0 %v562
    %593 = vmatpush.msra.mxu0 %v561
    %594 = vmatpush.msra.mxu0 %v560
    %595 = vmatpush.msra.mxu0 %v559
    %596 = vmatmul.f32.gmra.mxu0 %v557
    %v597 = vpop.f32.mrf.mxu0
    %v598 = vadd.f32 %v578, %v597
    %599 = vdwg.mxu0
    %vm600 = vcmp.ge.s32.totalorder %v506, 3
    %vm601 = vcmp.lt.s32.totalorder %v506, 5
    %vm602 = vmand %vm600, %vm601
    %v603 = vsel %vm602, %v598, -1e+30
    %604 = vmax.xlane.f32.xlu0 %v603
    %v605 = vpop.xlane.xlu0 %604
    %v606 = vsub.f32 %v603, %v605
    %v607 = vmul.f32 %v606, 1.442695
    %v608 = vpow.pop %v607
    %609 = vadd.xlane.f32.xlu0 %v608
    %v610 = vpop.xlane.xlu0 %609
    %v611 = vrcp.pop %v610
    %v612 = vmul.f32 %v610, %v611
    %v613 = vsub.f32 1.0, %v612
    %v614 = vmul.f32 %v611, %v613
    %v615 = vadd.f32 %v611, %v614
    %vm616 = vweird.f32 %v610
    %vm617 = vweird.f32 %v611
    %vm618 = vmor %vm616, %vm617
    %v619 = vsel %vm618, %v611, %v615
    %v620 = vand.u32 2147483647, %v610
    %vm621 = vcmp.eq.f32.partialorder %v620, 8.507059e+37
    %v622 = vand.u32 %v610, 2147483648
    %v623 = vor.u32 1.1754944e-38, %v622
    %v624 = vsel %vm621, %v623, %v619
    %v625 = vmul.f32 %v608, %v624
    %626 = vst [vmem:[#allocation10] sm:$0xff] %v419
    %v627 = vadd.f32 %v512, %v625
    %628 = vst [vmem:[#allocation11] sm:$0xff] %v627
    // Predicated region
    $region34: #{tpu_custom_call.1} parent=1 // pred_check
      _
    $region35: #{tpu_custom_call.1} parent=1 // pred_check_branch
      %630 = sbr.rel (0) target = $region37
    $region36: #{tpu_custom_call.1} parent=1 // pred_region
      %632 = vsyncadd [#allocation4], 0
      %s634 = sshll.u32 [#allocation10], 4
      %s635 = int_to_ptr.vmem [resolvable:$true] %s634
      %s636 = sshll.u32 %s4, 4
      %s637 = int_to_ptr.hbm [resolvable:$true] %s636
      %639 = dma.vmem_to_hbm [thread:$0]  %s635, 128, %s637, [#allocation4]
    $region37: #{tpu_custom_call.1} parent=1 // pred_fallthru
      _
    // Predicated region
    $region38: #{tpu_custom_call.1} parent=1 // pred_check
      _
    $region39: #{tpu_custom_call.1} parent=1 // pred_check_branch
      %641 = sbr.rel (0) target = $region41
    $region40: #{tpu_custom_call.1} parent=1 // pred_region
      %643 = vsyncadd [#allocation12], 0
      %s645 = sshll.u32 [#allocation11], 4
      %s646 = int_to_ptr.vmem [resolvable:$true] %s645
      %s647 = sshll.u32 %s5, 4
      %s648 = int_to_ptr.hbm [resolvable:$true] %s647
      %650 = dma.vmem_to_hbm [thread:$0]  %s646, 128, %s648, [#allocation12]
    $region41: #{tpu_custom_call.1} parent=1 // pred_fallthru
      _
    // Predicated region
    $region42: #{tpu_custom_call.1} parent=1 // pred_check
      _
    $region43: #{tpu_custom_call.1} parent=1 // pred_check_branch
      %652 = sbr.rel (0) target = $region45
    $region44: #{tpu_custom_call.1} parent=1 // pred_region
      %654 = dma.done [#allocation4], 128
    $region45: #{tpu_custom_call.1} parent=1 // pred_fallthru
      _
    // Predicated region
    $region46: #{tpu_custom_call.1} parent=1 // pred_check
      _
    $region47: #{tpu_custom_call.1} parent=1 // pred_check_branch
      %656 = sbr.rel (0) target = $region49
    $region48: #{tpu_custom_call.1} parent=1 // pred_region
      %658 = dma.done [#allocation12], 128
    $region49: #{tpu_custom_call.1} parent=1 // pred_fallthru
      _
    %659 = vsyncpa [#allocation3], 1
    %660 = vsyncpa [#allocation6], 1
    %661 = vsyncpa [#allocation9], 1
    %662 = vsyncpa [#allocation4], 1
    %663 = vsyncpa [#allocation12], 1

</llo_original>
